<compile_context>
chip_gen: v5e
topology: v5e:2x2
jax: 0.10.0
libtpu: 0.0.40
codegen_flags: <defaults>
</compile_context>

<pallas_src>
import jax
import jax.numpy as jnp
from jax.experimental import pallas as pl
from jax.experimental.pallas import tpu as pltpu

LN_EPS = 1e-5


def _round_up(x, m):
    return ((x + m - 1) // m) * m


def embeddings_kernel(wx_ref, pb_ref, w_ref, gamma_ref, beta_ref, out_ref):
    # wx_ref : (TM, E)  gathered word-embedding rows for this token tile
    # pb_ref : (TM, D)  precomputed (pos + type) @ W + b for this tile
    # w_ref  : (E, D)   dense projection weight (resident)
    # gamma/beta : (1, D) LayerNorm affine params
    x = wx_ref[...]
    y = jnp.dot(x, w_ref[...], preferred_element_type=jnp.float32) + pb_ref[...]

    # LayerNorm over the last dim (biased variance, eps=1e-5, like PyTorch).
    mean = jnp.mean(y, axis=-1, keepdims=True)
    var = jnp.mean((y - mean) ** 2, axis=-1, keepdims=True)
    y_hat = (y - mean) * jax.lax.rsqrt(var + LN_EPS)
    out_ref[...] = (y_hat * gamma_ref[...] + beta_ref[...]).astype(out_ref.dtype)
    # TODO(synk): dropout is identity here (eval mode); training-mode dropout
    # would use pltpu.prng_seed / pltpu.prng_random_bits.


def embeddings_forward(input_ids, params, *, tm=256):
    B, S = input_ids.shape
    N = B * S
    E = params["word_emb"].shape[1]

    dense_w = params.get("dense_w", None)
    if dense_w is not None:
        W = params["dense_w"]
        bias = params["dense_b"].reshape(1, -1)
    else:
        # No projection path (embedding_dim == transformer_dim): identity W.
        W = jnp.eye(E, dtype=params["word_emb"].dtype)
        bias = jnp.zeros((1, E), params["word_emb"].dtype)
    D = W.shape[1]

    # Token tile: multiple of 8 (sublane), capped at `tm` (128-512 is ideal).
    TM = min(tm, _round_up(N, 8))
    N_pad = _round_up(N, TM)
    n_tiles = N_pad // TM

    ids_flat = input_ids.reshape(N).astype(jnp.int32)
    ids_flat = jnp.pad(ids_flat, (0, N_pad - N))  # pad with token 0 (discarded)

    # Word-embedding gather in the wrapper (small vocab): contiguous (TM,E)
    # blocks feed the kernel instead of 128-byte per-row gather DMAs.
    # TODO(synk): for large vocab, replace with an in-kernel manual
    # double-buffered DMA row gather (memory_space=pl.ANY + make_async_copy).
    word_x = jnp.take(params["word_emb"], ids_flat, axis=0)          # (N_pad, E)

    # Fold the constant token-type term + bias, and distribute the projection
    # over the position term:  pos_bias[s] = (pos_emb[s+2] + type_emb[0]) @ W + b
    pos_rows = params["pos_emb"][2:S + 2] + params["type_emb"][0][None, :]
    pos_bias = pos_rows @ W + bias                                   # (S, D)
    pos_bias_flat = jnp.tile(pos_bias, (B, 1))                       # (N, D)
    pos_bias_flat = jnp.pad(pos_bias_flat, ((0, N_pad - N), (0, 0)))

    gamma = params["gamma"].reshape(1, D)
    beta = params["beta"].reshape(1, D)

    grid_spec = pltpu.PrefetchScalarGridSpec(
        num_scalar_prefetch=0,
        grid=(n_tiles,),
        in_specs=[
            pl.BlockSpec((TM, E), lambda i: (i, 0)),   # gathered word rows
            pl.BlockSpec((TM, D), lambda i: (i, 0)),   # pos/type/bias term
            pl.BlockSpec((E, D), lambda i: (0, 0)),    # dense weight (resident)
            pl.BlockSpec((1, D), lambda i: (0, 0)),    # LN gamma
            pl.BlockSpec((1, D), lambda i: (0, 0)),    # LN beta
        ],
        out_specs=pl.BlockSpec((TM, D), lambda i: (i, 0)),
    )

    out_flat = pl.pallas_call(
        embeddings_kernel,
        out_shape=jax.ShapeDtypeStruct((N_pad, D), jnp.float32),
        grid_spec=grid_spec,
        compiler_params=pltpu.CompilerParams(
            dimension_semantics=("parallel",)),
    )(word_x, pos_bias_flat, W, gamma, beta)

    # TODO(synk): if D < 128 in production, pad D to 128 (with masked LN stats)
    # for unmasked lane-dense stores; skipped here to keep LN exact over D.
    return out_flat[:N].reshape(B, S, D)


def reference_forward(input_ids, params):
    """Pure-JAX reference matching the PyTorch module's op order."""
    B, S = input_ids.shape
    pos_ids = jnp.arange(S, dtype=jnp.int32)[None, :] + 2
    x = (params["word_emb"][input_ids]
         + params["pos_emb"][pos_ids]
         + params["type_emb"][jnp.zeros_like(input_ids)])
    if params.get("dense_w", None) is not None:
        x = x @ params["dense_w"] + params["dense_b"][0]
    mean = x.mean(-1, keepdims=True)
    var = ((x - mean) ** 2).mean(-1, keepdims=True)
    x = (x - mean) / jnp.sqrt(var + LN_EPS)
    return x * params["gamma"][0] + params["beta"][0]


def init_params(key, config):
    E = config["embedding_dim"]
    D = config["transformer_dim"]
    k1, k2, k3, k4, k5 = jax.random.split(key, 5)
    params = {
        "word_emb": 0.02 * jax.random.normal(
            k1, (config["vocab_size"], E), jnp.float32),
        "pos_emb": 0.02 * jax.random.normal(
            k2, (config["max_seq_len"] + 2, E), jnp.float32),
        "type_emb": 0.02 * jax.random.normal(
            k3, (config["num_sen_type"], E), jnp.float32),
        "gamma": jnp.ones((1, D), jnp.float32),
        "beta": jnp.zeros((1, D), jnp.float32),
    }
    if E != D:
        params["dense_w"] = 0.02 * jax.random.normal(k4, (E, D), jnp.float32)
        params["dense_b"] = 0.02 * jax.random.normal(k5, (1, D), jnp.float32)
    return params


if __name__ == "__main__":
    config = {
        "vocab_size": 64,
        "max_seq_len": 16,
        "num_sen_type": 2,
        "embedding_dim": 32,
        "transformer_dim": 64,   # != embedding_dim -> projection path exercised
        "dropout_prob": 0.1,     # identity at inference
    }

    key = jax.random.PRNGKey(0)
    pkey, ikey = jax.random.split(key)
    params = init_params(pkey, config)

    B, S = 2, 8
    input_ids = jax.random.randint(ikey, (B, S), 0, config["vocab_size"],
                                   dtype=jnp.int32)

    out = embeddings_forward(input_ids, params)
    out = jax.block_until_ready(out)

    ref = reference_forward(input_ids, params)
    assert out.shape == (B, S, config["transformer_dim"])
    assert jnp.allclose(out, ref, atol=1e-4, rtol=1e-4), "mismatch vs reference"

    print("KERNEL_OK")
</pallas_src>

<mosaic_0001>
module attributes {stable_mosaic.version = 11 : i64} {
  func.func @embeddings_kernel(%arg0: i32, %arg1: memref<16x32xf32, #tpu.memory_space<vmem>>, %arg2: memref<16x64xf32, #tpu.memory_space<vmem>>, %arg3: memref<32x64xf32, #tpu.memory_space<vmem>>, %arg4: memref<1x64xf32, #tpu.memory_space<vmem>>, %arg5: memref<1x64xf32, #tpu.memory_space<vmem>>, %arg6: memref<16x64xf32, #tpu.memory_space<vmem>>) attributes {dimension_semantics = [#tpu.dimension_semantics<parallel>], iteration_bounds = array<i64: 1>, scalar_prefetch = 0 : i64, scratch_operands = 0 : i64, tpu.core_type = #tpu.core_type<tc>, window_params = [{transform_indices = @transform_0, window_bounds = array<i64: 16, 32>}, {transform_indices = @transform_1, window_bounds = array<i64: 16, 64>}, {pipeline_mode = #tpu.pipeline_mode<synchronous>, transform_indices = @transform_2, window_bounds = array<i64: 32, 64>}, {pipeline_mode = #tpu.pipeline_mode<synchronous>, transform_indices = @transform_3, window_bounds = array<i64: 1, 64>}, {pipeline_mode = #tpu.pipeline_mode<synchronous>, transform_indices = @transform_4, window_bounds = array<i64: 1, 64>}, {transform_indices = @transform_5, window_bounds = array<i64: 16, 64>}]} {
    %c0 = arith.constant 0 : index
    %c0_0 = arith.constant 0 : index
    %0 = vector.load %arg1[%c0, %c0_0] : memref<16x32xf32, #tpu.memory_space<vmem>>, vector<16x32xf32>
    %c0_1 = arith.constant 0 : index
    %c0_2 = arith.constant 0 : index
    %1 = vector.load %arg3[%c0_1, %c0_2] : memref<32x64xf32, #tpu.memory_space<vmem>>, vector<32x64xf32>
    %cst = arith.constant dense<0.000000e+00> : vector<16x64xf32>
    %2 = tpu.matmul %0, %1, %cst {dimension_numbers = #tpu.dot_dimension_numbers<[1], [0], [0], [1], [0, 0, 1, 1], [], []>} : vector<16x32xf32>, vector<32x64xf32>, vector<16x64xf32> -> vector<16x64xf32>
    %c0_3 = arith.constant 0 : index
    %c0_4 = arith.constant 0 : index
    %3 = vector.load %arg2[%c0_3, %c0_4] : memref<16x64xf32, #tpu.memory_space<vmem>>, vector<16x64xf32>
    %4 = arith.addf %2, %3 : vector<16x64xf32>
    %cst_5 = arith.constant dense<0.000000e+00> : vector<16xf32>
    %5 = vector.multi_reduction <add>, %4, %cst_5 [1] : vector<16x64xf32> to vector<16xf32>
    %6 = vector.shape_cast %5 : vector<16xf32> to vector<16x1xf32>
    %cst_6 = arith.constant 6.400000e+01 : f32
    %7 = vector.broadcast %cst_6 : f32 to vector<16x1xf32>
    %8 = arith.divf %6, %7 : vector<16x1xf32>
    %9 = vector.broadcast %8 : vector<16x1xf32> to vector<16x64xf32>
    %10 = arith.subf %4, %9 : vector<16x64xf32>
    %11 = arith.mulf %10, %10 : vector<16x64xf32>
    %cst_7 = arith.constant dense<0.000000e+00> : vector<16xf32>
    %12 = vector.multi_reduction <add>, %11, %cst_7 [1] : vector<16x64xf32> to vector<16xf32>
    %13 = vector.shape_cast %12 : vector<16xf32> to vector<16x1xf32>
    %cst_8 = arith.constant 6.400000e+01 : f32
    %14 = vector.broadcast %cst_8 : f32 to vector<16x1xf32>
    %15 = arith.divf %13, %14 : vector<16x1xf32>
    %16 = vector.broadcast %8 : vector<16x1xf32> to vector<16x64xf32>
    %17 = arith.subf %4, %16 : vector<16x64xf32>
    %cst_9 = arith.constant 9.99999974E-6 : f32
    %18 = vector.broadcast %cst_9 : f32 to vector<16x1xf32>
    %19 = arith.addf %15, %18 : vector<16x1xf32>
    %20 = math.rsqrt %19 : vector<16x1xf32>
    %21 = vector.broadcast %20 : vector<16x1xf32> to vector<16x64xf32>
    %22 = arith.mulf %17, %21 : vector<16x64xf32>
    %c0_10 = arith.constant 0 : index
    %c0_11 = arith.constant 0 : index
    %23 = vector.load %arg4[%c0_10, %c0_11] : memref<1x64xf32, #tpu.memory_space<vmem>>, vector<1x64xf32>
    %24 = vector.broadcast %23 : vector<1x64xf32> to vector<16x64xf32>
    %25 = arith.mulf %22, %24 : vector<16x64xf32>
    %c0_12 = arith.constant 0 : index
    %c0_13 = arith.constant 0 : index
    %26 = vector.load %arg5[%c0_12, %c0_13] : memref<1x64xf32, #tpu.memory_space<vmem>>, vector<1x64xf32>
    %27 = vector.broadcast %26 : vector<1x64xf32> to vector<16x64xf32>
    %28 = arith.addf %25, %27 : vector<16x64xf32>
    %c0_14 = arith.constant 0 : index
    %c0_15 = arith.constant 0 : index
    %29 = vector.load %arg6[%c0_14, %c0_15] : memref<16x64xf32, #tpu.memory_space<vmem>>, vector<16x64xf32>
    tpu.vector_store %arg6[%c0_14, %c0_15], %28 {strides = array<i32>} : memref<16x64xf32, #tpu.memory_space<vmem>>, vector<16x64xf32>,
    return
  }
  func.func @transform_0(%arg0: i32) -> (i32, i32) {
    %c0_i32 = arith.constant 0 : i32
    %c0_i32_0 = arith.constant 0 : i32
    return %arg0, %c0_i32 : i32, i32
  }
  func.func @transform_1(%arg0: i32) -> (i32, i32) {
    %c0_i32 = arith.constant 0 : i32
    %c0_i32_0 = arith.constant 0 : i32
    return %arg0, %c0_i32 : i32, i32
  }
  func.func @transform_2(%arg0: i32) -> (i32, i32) {
    %c0_i32 = arith.constant 0 : i32
    %c0_i32_0 = arith.constant 0 : i32
    %c0_i32_1 = arith.constant 0 : i32
    return %c0_i32, %c0_i32_0 : i32, i32
  }
  func.func @transform_3(%arg0: i32) -> (i32, i32) {
    %c0_i32 = arith.constant 0 : i32
    %c0_i32_0 = arith.constant 0 : i32
    %c0_i32_1 = arith.constant 0 : i32
    return %c0_i32, %c0_i32_0 : i32, i32
  }
  func.func @transform_4(%arg0: i32) -> (i32, i32) {
    %c0_i32 = arith.constant 0 : i32
    %c0_i32_0 = arith.constant 0 : i32
    %c0_i32_1 = arith.constant 0 : i32
    return %c0_i32, %c0_i32_0 : i32, i32
  }
  func.func @transform_5(%arg0: i32) -> (i32, i32) {
    %c0_i32 = arith.constant 0 : i32
    %c0_i32_0 = arith.constant 0 : i32
    return %arg0, %c0_i32 : i32, i32
  }
}

</mosaic_0001>

<llo_original>
// kernel: tpu_custom_call.1
$region0: #{tpu_custom_call.1}
  #allocation0 [shape = 'u32[]', space=smem, size = 0x4, offset = 0x4, fixed_abs, tag = 'smem constant byte address 0x4 - core index']
  #allocation1 [shape = 'u32[72,128]{1,0:T(1,128)}', space=vmem, size = 0x9000, scoped, tag = 'internal scratch']
  %s0 = inlined_call_operand.hbm [shape: f32[16,32], index: 0, kind: input, shape index: {}]
  %s1 = inlined_call_operand.hbm [shape: f32[16,64], index: 1, kind: input, shape index: {}]
  %s2 = inlined_call_operand.hbm [shape: f32[32,64], index: 2, kind: input, shape index: {}]
  %s3 = inlined_call_operand.vmem [shape: f32[1,64], index: 3, kind: input, shape index: {}]
  %s4 = inlined_call_operand.vmem [shape: f32[1,64], index: 4, kind: input, shape index: {}]
  %s5 = inlined_call_operand.hbm [shape: f32[16,64], index: 5, kind: output, shape index: {}]
  %s6 = sld [smem:[#allocation0]]
  $region42: #{tpu_custom_call.1} parent=0
    _
  %s8 = ssub.s32 1, %s6
  %s9 = scalar_select 0, %s8, %s6
  $region1: #{tpu_custom_call.1} parent=0
    #allocation2 [shape = 'u8[8192]{0}', space=vmem, size = 0x2000, scoped, tag = 'input window, operand 0, single buffered']
    #allocation3 [shape = 's32[1]{0}', space=sflag, size = 0x4, scoped, tag = 'scoped memory for tpu_custom_call.1']
    #allocation4 [shape = 's32[1]{0}', space=sflag, size = 0x4, scoped, tag = 'scoped memory for tpu_custom_call.1']
    #allocation5 [shape = 'u8[8192]{0}', space=vmem, size = 0x2000, scoped, tag = 'input window, operand 1, single buffered']
    #allocation6 [shape = 's32[1]{0}', space=sflag, size = 0x4, scoped, tag = 'scoped memory for tpu_custom_call.1']
    #allocation7 [shape = 'u8[16384]{0}', space=vmem, size = 0x4000, scoped, tag = 'input window, operand 2, single buffered']
    #allocation8 [shape = 'u8[8192]{0}', space=vmem, size = 0x2000, scoped, tag = 'output window, operand 0, single buffered']
    %10 = vsyncpa [#allocation3], 0
    %11 = vsyncpa [#allocation6], 0
    %12 = vsyncpa [#allocation4], 0
    // Predicated region
    $region2: #{tpu_custom_call.1} parent=1 // pred_check
      _
    $region3: #{tpu_custom_call.1} parent=1 // pred_check_branch
      %14 = sbr.rel (0) target = $region5
    $region4: #{tpu_custom_call.1} parent=1 // pred_region
      %16 = vsyncadd [#allocation3], 0
      %s17 = sshll.u32 %s0, 4
      %s18 = int_to_ptr.hbm [resolvable:$true] %s17
      %s19 = sshll.u32 [#allocation2], 4
      %s20 = int_to_ptr.vmem [resolvable:$true] %s19
      %25 = dma.hbm_to_vmem [thread:$0]  %s18, 256, %s20, [#allocation3], 128, 128, 8
    $region5: #{tpu_custom_call.1} parent=1 // pred_fallthru
      _
    // Predicated region
    $region6: #{tpu_custom_call.1} parent=1 // pred_check
      _
    $region7: #{tpu_custom_call.1} parent=1 // pred_check_branch
      %27 = sbr.rel (0) target = $region9
    $region8: #{tpu_custom_call.1} parent=1 // pred_region
      %29 = vsyncadd [#allocation6], 0
      %s30 = sshll.u32 %s1, 4
      %s31 = int_to_ptr.hbm [resolvable:$true] %s30
      %s32 = sshll.u32 [#allocation5], 4
      %s33 = int_to_ptr.vmem [resolvable:$true] %s32
      %38 = dma.hbm_to_vmem [thread:$0]  %s31, 256, %s33, [#allocation6], 128, 128, 8
    $region9: #{tpu_custom_call.1} parent=1 // pred_fallthru
      _
    // Predicated region
    $region10: #{tpu_custom_call.1} parent=1 // pred_check
      _
    $region11: #{tpu_custom_call.1} parent=1 // pred_check_branch
      %40 = sbr.rel (0) target = $region13
    $region12: #{tpu_custom_call.1} parent=1 // pred_region
      %42 = vsyncadd [#allocation6], 0
      %s43 = sshll.u32 %s2, 4
      %s44 = int_to_ptr.hbm [resolvable:$true] %s43
      %s45 = sshll.u32 [#allocation7], 4
      %s46 = int_to_ptr.vmem [resolvable:$true] %s45
      %51 = dma.hbm_to_vmem [thread:$0]  %s44, 512, %s46, [#allocation6], 128, 128, 8
    $region13: #{tpu_custom_call.1} parent=1 // pred_fallthru
      _
    // Predicated region
    $region14: #{tpu_custom_call.1} parent=1 // pred_check
      _
    $region15: #{tpu_custom_call.1} parent=1 // pred_check_branch
      %53 = sbr.rel (0) target = $region17
    $region16: #{tpu_custom_call.1} parent=1 // pred_region
      _
    $region17: #{tpu_custom_call.1} parent=1 // pred_fallthru
      _
    // Predicated region
    $region18: #{tpu_custom_call.1} parent=1 // pred_check
      _
    $region19: #{tpu_custom_call.1} parent=1 // pred_check_branch
      %55 = sbr.rel (0) target = $region21
    $region20: #{tpu_custom_call.1} parent=1 // pred_region
      _
    $region21: #{tpu_custom_call.1} parent=1 // pred_fallthru
      _
    // Predicated region
    $region22: #{tpu_custom_call.1} parent=1 // pred_check
      _
    $region23: #{tpu_custom_call.1} parent=1 // pred_check_branch
      %57 = sbr.rel (0) target = $region25
    $region24: #{tpu_custom_call.1} parent=1 // pred_region
      %59 = dma.done [#allocation3], 256
    $region25: #{tpu_custom_call.1} parent=1 // pred_fallthru
      _
    // Predicated region
    $region26: #{tpu_custom_call.1} parent=1 // pred_check
      _
    $region27: #{tpu_custom_call.1} parent=1 // pred_check_branch
      %61 = sbr.rel (0) target = $region29
    $region28: #{tpu_custom_call.1} parent=1 // pred_region
      %63 = dma.done [#allocation6], 256
    $region29: #{tpu_custom_call.1} parent=1 // pred_fallthru
      _
    // Predicated region
    $region30: #{tpu_custom_call.1} parent=1 // pred_check
      _
    $region31: #{tpu_custom_call.1} parent=1 // pred_check_branch
      %65 = sbr.rel (0) target = $region33
    $region32: #{tpu_custom_call.1} parent=1 // pred_region
      %67 = dma.done [#allocation6], 512
    $region33: #{tpu_custom_call.1} parent=1 // pred_fallthru
      _
    %v68 = vld [vmem:[#allocation2] sm:$0xff]
    %v69 = vld [vmem:[#allocation2 + $0x8] sm:$0xff]
    %v70 = vld [vmem:[#allocation7] sm:$0xff]
    %v71 = vld [vmem:[#allocation7 + $0x8] sm:$0xff]
    %v72 = vld [vmem:[#allocation7 + $0x10] sm:$0xff]
    %v73 = vld [vmem:[#allocation7 + $0x18] sm:$0xff]
    %v74 = vld [vmem:[#allocation5] sm:$0xff]
    %v75 = vld [vmem:[#allocation5 + $0x8] sm:$0xff]
    %vm76 = vcmask 261120
    %v78 = vsel %vm76, %v68, 0
    %v81 = vsel %vm76, %v69, 0
    %83 = vmatpush.msra.mxu0 0.0
    %84 = vmatpush.msra.mxu0 0.0
    %85 = vmatpush.msra.mxu0 0.0
    %86 = vmatpush.msra.mxu0 0.0
    %87 = vmatpush.msra.mxu0 0.0
    %88 = vmatpush.msra.mxu0 0.0
    %89 = vmatpush.msra.mxu0 0.0
    %90 = vmatpush.msra.mxu0 0.0
    %91 = vmatpush.msra.mxu0 0.0
    %92 = vmatpush.msra.mxu0 0.0
    %93 = vmatpush.msra.mxu0 0.0
    %94 = vmatpush.msra.mxu0 0.0
    %95 = vmatpush.msra.mxu0 %v73
    %96 = vmatpush.msra.mxu0 %v72
    %97 = vmatpush.msra.mxu0 %v71
    %98 = vmatpush.msra.mxu0 %v70
    %99 = vmatmul.f32.gmra.mxu0 %v78
    %v100 = vpop.f32.mrf.mxu0
    %v101 = vadd.f32 %v74, %v100
    %102 = vmatmul.f32.gmra.mxu0 %v81
    %v103 = vpop.f32.mrf.mxu0
    %v104 = vadd.f32 %v75, %v103
    %105 = vdwg.mxu0
    %vm106 = vcmask 523264
    %v107 = vsel %vm106, %v101, 0.0
    %108 = vadd.xlane.f32.xlu0 %v107
    %v109 = vpop.xlane.xlu0 %108
    %v110 = vsel %vm106, %v104, 0.0
    %111 = vadd.xlane.f32.xlu0 %v110
    %v112 = vpop.xlane.xlu0 %111
    %v113 = vrcp.pop 64.0
    %v114 = vmul.f32 64.0, %v113
    %v115 = vsub.f32 1.0, %v114
    %v116 = vmul.f32 %v113, %v115
    %v117 = vadd.f32 %v113, %v116
    %vm118 = vweird.f32 %v113
    %v119 = vsel %vm118, %v113, %v117
    %v120 = vmul.f32 %v109, %v119
    %v121 = vmul.f32 %v112, %v119
    %v122 = vsub.f32 %v101, %v120
    %v123 = vsub.f32 %v104, %v121
    %v124 = vmul.f32 %v122, %v122
    %v125 = vmul.f32 %v123, %v123
    %v126 = vsel %vm106, %v124, 0.0
    %127 = vadd.xlane.f32.xlu0 %v126
    %v128 = vpop.xlane.xlu0 %127
    %v129 = vsel %vm106, %v125, 0.0
    %130 = vadd.xlane.f32.xlu0 %v129
    %v131 = vpop.xlane.xlu0 %130
    %v132 = vmul.f32 %v128, %v119
    %v133 = vmul.f32 %v131, %v119
    %v134 = vadd.f32 %v132, 1e-05
    %v135 = vadd.f32 %v133, 1e-05
    %v136 = vrsqrt.pop %v134
    %v137 = vmul.f32 %v136, %v134
    %v138 = vmul.f32 %v137, %v136
    %v139 = vmul.f32 0.5, %v138
    %v140 = vsub.f32 1.5, %v139
    %v141 = vmul.f32 %v136, %v140
    %vm142 = vweird.f32 %v134
    %vm143 = vweird.f32 %v136
    %vm144 = vmor %vm142, %vm143
    %v145 = vsel %vm144, %v136, %v141
    %v146 = vrsqrt.pop %v135
    %v147 = vmul.f32 %v146, %v135
    %v148 = vmul.f32 %v147, %v146
    %v149 = vmul.f32 0.5, %v148
    %v150 = vsub.f32 1.5, %v149
    %v151 = vmul.f32 %v146, %v150
    %vm152 = vweird.f32 %v135
    %vm153 = vweird.f32 %v146
    %vm154 = vmor %vm152, %vm153
    %v155 = vsel %vm154, %v146, %v151
    %v156 = vmul.f32 %v122, %v145
    %v157 = vmul.f32 %v123, %v155
    %v158 = vld [vmem:[%s3] sm:$0x1]
    %v160 = vperm.slane %v158, 0
    %v162 = vmul.f32 %v156, %v160
    %v163 = vmul.f32 %v157, %v160
    %v164 = vld [vmem:[%s4] sm:$0x1]
    %v166 = vperm.slane %v164, 0
    %v168 = vadd.f32 %v162, %v166
    %v169 = vadd.f32 %v163, %v166
    %170 = vst.msk [vmem:[#allocation8] sm:$0xff] %vm106, %v168
    %171 = vst.msk [vmem:[#allocation8 + $0x8] sm:$0xff] %vm106, %v169
    // Predicated region
    $region34: #{tpu_custom_call.1} parent=1 // pred_check
      _
    $region35: #{tpu_custom_call.1} parent=1 // pred_check_branch
      %173 = sbr.rel (0) target = $region37
    $region36: #{tpu_custom_call.1} parent=1 // pred_region
      %175 = vsyncadd [#allocation4], 0
      %s176 = sshll.u32 [#allocation8], 4
      %s177 = int_to_ptr.vmem [resolvable:$true] %s176
      %s178 = sshll.u32 %s5, 4
      %s179 = int_to_ptr.hbm [resolvable:$true] %s178
      %184 = dma.vmem_to_hbm [thread:$0]  %s177, 256, %s179, [#allocation4], 128, 128, 8
    $region37: #{tpu_custom_call.1} parent=1 // pred_fallthru
      _
    // Predicated region
    $region38: #{tpu_custom_call.1} parent=1 // pred_check
      _
    $region39: #{tpu_custom_call.1} parent=1 // pred_check_branch
      %186 = sbr.rel (0) target = $region41
    $region40: #{tpu_custom_call.1} parent=1 // pred_region
      %188 = dma.done [#allocation4], 256
    $region41: #{tpu_custom_call.1} parent=1 // pred_fallthru
      _
    %189 = vsyncpa [#allocation3], 1
    %190 = vsyncpa [#allocation6], 1
    %191 = vsyncpa [#allocation4], 1

</llo_original>
